<compile_context>
chip_gen: v7x
topology: tpu7x:2x2x1
jax: 0.10.0
libtpu: 0.0.40
codegen_flags: <defaults>
</compile_context>

<pallas_src>
import functools
import math

import jax
import jax.numpy as jnp
from jax import lax
from jax.experimental import pallas as pl
from jax.experimental.pallas import tpu as pltpu

_MIB = 1024 * 1024


def _vmem_budget_bytes():
    """~70% of per-core VMEM (v7x has 64 MiB/TC, v5e/v6e 128 MiB)."""
    cap = 64 * _MIB  # conservative fallback (v7x size) if query unavailable
    try:
        info = pltpu.get_tpu_info()
        cap = int(getattr(info, "vmem_capacity_bytes", cap))
    except Exception:
        pass
    return int(min(cap * 0.7, 96 * _MIB))


# ----------------------------------------------------------------------------------
# Tiled Linear: out = act(x @ W + b), W already in (K, N) layout.
# Optional fused epilogue: residual add + LayerNorm (requires tn == N).
# ----------------------------------------------------------------------------------
def _linear_kernel(x_ref, w_ref, b_ref, o_ref, acc_ref, *, activation):
    k = pl.program_id(2)

    @pl.when(k == 0)
    def _():
        acc_ref[...] = jnp.zeros_like(acc_ref)

    acc_ref[...] += jnp.dot(x_ref[...], w_ref[...],
                            preferred_element_type=jnp.float32)

    @pl.when(k == pl.num_programs(2) - 1)
    def _():
        h = acc_ref[...] + b_ref[...].astype(jnp.float32)
        if activation == "gelu":
            # exact (erf-based) GELU to match ACT2FN["gelu"]
            h = jax.nn.gelu(h, approximate=False)
        o_ref[...] = h.astype(o_ref.dtype)


def _linear_ln_kernel(x_ref, w_ref, b_ref, res_ref, g_ref, bt_ref, o_ref, acc_ref, *, eps):
    k = pl.program_id(2)

    @pl.when(k == 0)
    def _():
        acc_ref[...] = jnp.zeros_like(acc_ref)

    acc_ref[...] += jnp.dot(x_ref[...], w_ref[...],
                            preferred_element_type=jnp.float32)

    @pl.when(k == pl.num_programs(2) - 1)
    def _():
        h = acc_ref[...] + b_ref[...].astype(jnp.float32)
        h = h + res_ref[...].astype(jnp.float32)
        mean = jnp.mean(h, axis=-1, keepdims=True)
        var = jnp.mean(h * h, axis=-1, keepdims=True) - mean * mean  # single-pass E[x^2]-mu^2
        y = (h - mean) * lax.rsqrt(var + eps)
        y = y * g_ref[...].astype(jnp.float32) + bt_ref[...].astype(jnp.float32)
        o_ref[...] = y.astype(o_ref.dtype)


def _choose_tiles(M, N, K, esz, fuse_ln, budget):
    # tm: cap at 1024, and prefer a tile strictly smaller than M so a `parallel`
    # axis has >= 2 blocks (keeps both v7x TensorCores busy) when M allows it.
    tm_prefs = (1024, 512, 256, 128, 64, 32, 16, 8)
    # tn / tk: 256-aligned preferences for v6e/v7x 256x256 MXUs; prefer full-K tiles.
    tn_prefs = (1024, 768, 512, 256, 128)
    tk_prefs = (2048, 1536, 1024, 768, 512, 256, 128)

    tm_cands = [p for p in tm_prefs if p < M and M % p == 0] or [M]
    tn_cands = [N] if fuse_ln else ([p for p in tn_prefs if p <= N and N % p == 0] or [N])
    tk_cands = [p for p in tk_prefs if p <= K and K % p == 0] or [K]

    def need(tm, tn, tk):
        n = 2 * (tm * tk + tk * tn + tm * tn) * esz  # double-buffered x / w / out tiles
        n += tm * tn * 4                              # f32 accumulator
        n += 8 * tn * esz                             # bias (+ gamma/beta) tiles
        if fuse_ln:
            n += 2 * tm * tn * esz                    # residual tile
        return n + 2 * _MIB                           # compiler scratch headroom

    for tn in tn_cands:
        for tm in tm_cands:
            for tk in tk_cands:
                if need(tm, tn, tk) <= budget:
                    return tm, tn, tk
    # TODO(synk): for huge oddly-sized dims nothing fits the budget; inputs should be
    # padded to tile multiples instead of taking the full extent.
    return tm_cands[-1], tn_cands[-1], tk_cands[-1]


def linear(x2d, w_t, bias, *, activation=None,
           residual=None, ln_gamma=None, ln_beta=None, eps=1e-12):
    """out = act(x2d @ w_t + bias); optional fused residual-add + LayerNorm.

    x2d: (M, K); w_t: (K, N) (pre-transposed once from the PyTorch (N, K) layout);
    bias: (N,). If residual/ln_gamma/ln_beta are given, computes
    LayerNorm(x2d @ w_t + bias + residual) with one VMEM-resident epilogue (tn == N).
    """
    M, K = x2d.shape
    N = w_t.shape[1]
    fuse_ln = residual is not None
    esz = x2d.dtype.itemsize

    budget = _vmem_budget_bytes()
    tm, tn, tk = _choose_tiles(M, N, K, esz, fuse_ln, budget)
    grid = (M // tm, N // tn, K // tk)

    b2d = bias.reshape(1, N)

    cost = pl.CostEstimate(
        flops=2 * M * N * K,
        transcendentals=(M * N if activation == "gelu" else 0),
        bytes_accessed=(M * K + N * K + M * N * (2 if fuse_ln else 1) + N) * esz,
    )

    in_specs = [
        pl.BlockSpec((tm, tk), lambda i, j, k: (i, k)),
        pl.BlockSpec((tk, tn), lambda i, j, k: (k, j)),   # canonical (K, N) weight
        pl.BlockSpec((1, tn), lambda i, j, k: (0, j)),    # lane-aligned bias tile
    ]
    args = [x2d, w_t, b2d]

    if fuse_ln:
        kernel = functools.partial(_linear_ln_kernel, eps=eps)
        in_specs += [
            pl.BlockSpec((tm, tn), lambda i, j, k: (i, j)),  # residual (constant in k -> no re-DMA)
            pl.BlockSpec((1, tn), lambda i, j, k: (0, j)),   # gamma
            pl.BlockSpec((1, tn), lambda i, j, k: (0, j)),   # beta
        ]
        args += [residual, ln_gamma.reshape(1, N), ln_beta.reshape(1, N)]
    else:
        kernel = functools.partial(_linear_kernel, activation=activation)

    return pl.pallas_call(
        kernel,
        out_shape=jax.ShapeDtypeStruct((M, N), x2d.dtype),
        grid_spec=pltpu.PrefetchScalarGridSpec(
            num_scalar_prefetch=0,
            grid=grid,
            in_specs=in_specs,
            out_specs=pl.BlockSpec((tm, tn), lambda i, j, k: (i, j)),
            scratch_shapes=[pltpu.VMEM((tm, tn), jnp.float32)],
        ),
        compiler_params=pltpu.CompilerParams(
            dimension_semantics=("parallel", "parallel", "arbitrary"),
            vmem_limit_bytes=budget,
        ),
        cost_estimate=cost,
    )(*args)


# ----------------------------------------------------------------------------------
# Attention: one grid step per batch element, all heads processed in-kernel from a
# single (S, 3H) QKV slab; output written as a lane-dense (S, H) block.
# ----------------------------------------------------------------------------------
def _attention_kernel(qkv_ref, o_ref, *, num_heads, hidden, scale):
    H = hidden
    d = H // num_heads
    # TODO(synk): additive attention_mask / head_mask not wired (module called with None).
    for h in range(num_heads):
        q = qkv_ref[:, h * d:(h + 1) * d].astype(jnp.float32) * scale        # (S, d)
        k = qkv_ref[:, H + h * d:H + (h + 1) * d].astype(jnp.float32)        # (S, d)
        v = qkv_ref[:, 2 * H + h * d:2 * H + (h + 1) * d].astype(jnp.float32)

        s = lax.dot_general(q, k, (((1,), (1,)), ((), ())),
                            preferred_element_type=jnp.float32)              # (S, S)
        s = s - jnp.max(s, axis=-1, keepdims=True)
        p = jnp.exp(s)
        denom = jnp.sum(p, axis=-1, keepdims=True)                           # (S, 1)
        ctx = jnp.dot(p, v, preferred_element_type=jnp.float32)              # (S, d)
        # Scale the (S, d) context by 1/denom instead of dividing the (S, S) matrix.
        ctx = ctx * pl.reciprocal(denom, approx=False)
        o_ref[:, h * d:(h + 1) * d] = ctx.astype(o_ref.dtype)


def fused_attention(qkv, *, num_heads):
    """qkv: (B, S, 3H) with columns [Q | K | V] -> context (B, S, H)."""
    B, S, H3 = qkv.shape
    H = H3 // 3
    d = H // num_heads
    budget = _vmem_budget_bytes()
    # TODO(synk): for long sequences (S >= ~1024 on v7x) this should switch to a
    # KV-tiled online-softmax (flash) loop instead of materializing (S, S) per head.
    return pl.pallas_call(
        functools.partial(_attention_kernel, num_heads=num_heads, hidden=H,
                          scale=1.0 / math.sqrt(d)),
        out_shape=jax.ShapeDtypeStruct((B, S, H), qkv.dtype),
        grid_spec=pltpu.PrefetchScalarGridSpec(
            num_scalar_prefetch=0,
            grid=(B,),
            in_specs=[pl.BlockSpec((None, S, H3), lambda b: (b, 0, 0))],
            out_specs=pl.BlockSpec((None, S, H), lambda b: (b, 0, 0)),
        ),
        compiler_params=pltpu.CompilerParams(
            dimension_semantics=("parallel",),
            vmem_limit_bytes=budget,
        ),
    )(qkv)


# ----------------------------------------------------------------------------------
# BertLayer / BertEncoder forward (eval mode: dropout = identity).
# ----------------------------------------------------------------------------------
def prepare_layer_params(p):
    """Convert PyTorch-layout params into kernel layout (fused QKV, (K, N) weights)."""
    qkv_w = jnp.concatenate([p["q_w"], p["k_w"], p["v_w"]], axis=0)   # (3H, H)
    return {
        "qkv_w_t": jnp.asarray(qkv_w.T),                              # (H, 3H)
        "qkv_b": jnp.concatenate([p["q_b"], p["k_b"], p["v_b"]]),     # (3H,)
        "ao_w_t": jnp.asarray(p["ao_w"].T),                           # (H, H)
        "ao_b": p["ao_b"],
        "i_w_t": jnp.asarray(p["i_w"].T),                             # (H, I)
        "i_b": p["i_b"],
        "o_w_t": jnp.asarray(p["o_w"].T),                             # (I, H)
        "o_b": p["o_b"],
        "ln1_g": p["ln1_g"], "ln1_b": p["ln1_b"],
        "ln2_g": p["ln2_g"], "ln2_b": p["ln2_b"],
    }


def bert_layer(hidden_states, p, *, num_heads, eps):
    B, S, H = hidden_states.shape
    M = B * S
    x2d = hidden_states.reshape(M, H)

    # Fused QKV projection: one GEMM reading x once, producing (M, 3H).
    qkv = linear(x2d, p["qkv_w_t"], p["qkv_b"])
    ctx = fused_attention(qkv.reshape(B, S, 3 * H), num_heads=num_heads)  # (B, S, H)

    # Attention output projection with fused residual-add + LayerNorm.
    attn_out = linear(ctx.reshape(M, H), p["ao_w_t"], p["ao_b"],
                      residual=x2d, ln_gamma=p["ln1_g"], ln_beta=p["ln1_b"], eps=eps)

    # Feed-forward: GELU intermediate, then output projection with fused add + LN.
    inter = linear(attn_out, p["i_w_t"], p["i_b"], activation="gelu")
    out = linear(inter, p["o_w_t"], p["o_b"],
                 residual=attn_out, ln_gamma=p["ln2_g"], ln_beta=p["ln2_b"], eps=eps)
    return out.reshape(B, S, H)


def bert_encoder(hidden_states, layer_params, *, num_heads, eps=1e-12):
    # TODO(synk): attention_mask / head_mask / gradient_checkpointing / output_attentions
    # not implemented (equivalent to the module called with mask=None, eval mode).
    for p in layer_params:
        hidden_states = bert_layer(hidden_states, p, num_heads=num_heads, eps=eps)
    return hidden_states


# ----------------------------------------------------------------------------------
# Pure-JAX reference for correctness checking (PyTorch-layout params).
# ----------------------------------------------------------------------------------
def _ref_layer(x, p, num_heads, eps):
    B, S, H = x.shape
    d = H // num_heads

    def lin(t, w, b):
        return t @ w.T + b

    def ln(t, g, bb):
        mu = jnp.mean(t, axis=-1, keepdims=True)
        var = jnp.mean((t - mu) ** 2, axis=-1, keepdims=True)
        return (t - mu) / jnp.sqrt(var + eps) * g + bb

    def split(t):
        return t.reshape(B, S, num_heads, d).transpose(0, 2, 1, 3)

    q = split(lin(x, p["q_w"], p["q_b"]))
    k = split(lin(x, p["k_w"], p["k_b"]))
    v = split(lin(x, p["v_w"], p["v_b"]))
    s = jnp.einsum("bhqd,bhkd->bhqk", q, k) / math.sqrt(d)
    a = jax.nn.softmax(s, axis=-1)
    ctx = jnp.einsum("bhqk,bhkd->bhqd", a, v).transpose(0, 2, 1, 3).reshape(B, S, H)
    ao = ln(lin(ctx, p["ao_w"], p["ao_b"]) + x, p["ln1_g"], p["ln1_b"])
    inter = jax.nn.gelu(lin(ao, p["i_w"], p["i_b"]), approximate=False)
    return ln(lin(inter, p["o_w"], p["o_b"]) + ao, p["ln2_g"], p["ln2_b"])


def _ref_encoder(x, layer_params, num_heads, eps):
    for p in layer_params:
        x = _ref_layer(x, p, num_heads, eps)
    return x


if __name__ == "__main__":
    batch, seq, hidden, num_heads, intermediate, num_layers = 2, 8, 32, 4, 128, 2
    eps = 1e-12

    key = jax.random.PRNGKey(0)
    key, kx = jax.random.split(key)
    hidden_states = jax.random.normal(kx, (batch, seq, hidden), dtype=jnp.float32)

    def make_layer_params(k):
        ks = jax.random.split(k, 12)
        f32 = jnp.float32
        return {
            "q_w": jax.random.normal(ks[0], (hidden, hidden), f32) * 0.05,
            "q_b": jax.random.normal(ks[1], (hidden,), f32) * 0.02,
            "k_w": jax.random.normal(ks[2], (hidden, hidden), f32) * 0.05,
            "k_b": jax.random.normal(ks[3], (hidden,), f32) * 0.02,
            "v_w": jax.random.normal(ks[4], (hidden, hidden), f32) * 0.05,
            "v_b": jax.random.normal(ks[5], (hidden,), f32) * 0.02,
            "ao_w": jax.random.normal(ks[6], (hidden, hidden), f32) * 0.05,
            "ao_b": jax.random.normal(ks[7], (hidden,), f32) * 0.02,
            "i_w": jax.random.normal(ks[8], (intermediate, hidden), f32) * 0.05,
            "i_b": jax.random.normal(ks[9], (intermediate,), f32) * 0.02,
            "o_w": jax.random.normal(ks[10], (hidden, intermediate), f32) * 0.05,
            "o_b": jax.random.normal(ks[11], (hidden,), f32) * 0.02,
            "ln1_g": jnp.ones((hidden,), f32),
            "ln1_b": jnp.zeros((hidden,), f32),
            "ln2_g": jnp.ones((hidden,), f32),
            "ln2_b": jnp.zeros((hidden,), f32),
        }

    key, *lkeys = jax.random.split(key, num_layers + 1)
    torch_layout_params = [make_layer_params(k) for k in lkeys]
    kernel_params = [prepare_layer_params(p) for p in torch_layout_params]

    out = bert_encoder(hidden_states, kernel_params, num_heads=num_heads, eps=eps)
    out = jax.block_until_ready(out)

    with jax.default_matmul_precision("highest"):
        ref = _ref_encoder(hidden_states, torch_layout_params, num_heads, eps)

    assert out.shape == (batch, seq, hidden)
    max_err = float(jnp.max(jnp.abs(out - ref)))
    assert jnp.allclose(out, ref, atol=5e-3, rtol=5e-3), f"max_err={max_err}"

    print("KERNEL_OK")
</pallas_src>

<mosaic_0001>
module attributes {stable_mosaic.version = 11 : i64} {
  func.func @_linear_kernel(%arg0: i32, %arg1: i32, %arg2: i32, %arg3: memref<8x32xf32, #tpu.memory_space<vmem>>, %arg4: memref<32x96xf32, #tpu.memory_space<vmem>>, %arg5: memref<1x96xf32, #tpu.memory_space<vmem>>, %arg6: memref<8x96xf32, #tpu.memory_space<vmem>>, %arg7: memref<8x96xf32, #tpu.memory_space<vmem>>) attributes {dimension_semantics = [#tpu.dimension_semantics<parallel>, #tpu.dimension_semantics<parallel>, #tpu.dimension_semantics<arbitrary>], iteration_bounds = array<i64: 2, 1, 1>, scalar_prefetch = 0 : i64, scratch_operands = 1 : i64, tpu.core_type = #tpu.core_type<tc>, window_params = [{transform_indices = @transform_0, window_bounds = array<i64: 8, 32>}, {transform_indices = @transform_1, window_bounds = array<i64: 32, 96>}, {transform_indices = @transform_2, window_bounds = array<i64: 1, 96>}, {transform_indices = @transform_3, window_bounds = array<i64: 8, 96>}]} {
    %c0_i32 = arith.constant 0 : i32
    %0 = arith.cmpi eq, %arg2, %c0_i32 : i32
    %1 = arith.extui %0 : i1 to i32
    %c0_i32_0 = arith.constant 0 : i32
    %2 = arith.cmpi ne, %1, %c0_i32_0 : i32
    scf.if %2 {
      %cst_10 = arith.constant 0.000000e+00 : f32
      %12 = vector.broadcast %cst_10 : f32 to vector<8x96xf32>
      %c0_11 = arith.constant 0 : index
      %c0_12 = arith.constant 0 : index
      %13 = vector.load %arg7[%c0_11, %c0_12] : memref<8x96xf32, #tpu.memory_space<vmem>>, vector<8x96xf32>
      tpu.vector_store %arg7[%c0_11, %c0_12], %12 {strides = array<i32>} : memref<8x96xf32, #tpu.memory_space<vmem>>, vector<8x96xf32>,
    } else {
    }
    %c0 = arith.constant 0 : index
    %c0_1 = arith.constant 0 : index
    %3 = vector.load %arg7[%c0, %c0_1] : memref<8x96xf32, #tpu.memory_space<vmem>>, vector<8x96xf32>
    %c0_2 = arith.constant 0 : index
    %c0_3 = arith.constant 0 : index
    %4 = vector.load %arg3[%c0_2, %c0_3] : memref<8x32xf32, #tpu.memory_space<vmem>>, vector<8x32xf32>
    %c0_4 = arith.constant 0 : index
    %c0_5 = arith.constant 0 : index
    %5 = vector.load %arg4[%c0_4, %c0_5] : memref<32x96xf32, #tpu.memory_space<vmem>>, vector<32x96xf32>
    %cst = arith.constant dense<0.000000e+00> : vector<8x96xf32>
    %6 = tpu.matmul %4, %5, %cst {dimension_numbers = #tpu.dot_dimension_numbers<[1], [0], [0], [1], [0, 0, 1, 1], [], []>} : vector<8x32xf32>, vector<32x96xf32>, vector<8x96xf32> -> vector<8x96xf32>
    %7 = arith.addf %3, %6 : vector<8x96xf32>
    %c0_6 = arith.constant 0 : index
    %c0_7 = arith.constant 0 : index
    %8 = vector.load %arg7[%c0_6, %c0_7] : memref<8x96xf32, #tpu.memory_space<vmem>>, vector<8x96xf32>
    tpu.vector_store %arg7[%c0_6, %c0_7], %7 {strides = array<i32>} : memref<8x96xf32, #tpu.memory_space<vmem>>, vector<8x96xf32>,
    %c0_i32_8 = arith.constant 0 : i32
    %9 = arith.cmpi eq, %arg2, %c0_i32_8 : i32
    %10 = arith.extui %9 : i1 to i32
    %c0_i32_9 = arith.constant 0 : i32
    %11 = arith.cmpi ne, %10, %c0_i32_9 : i32
    scf.if %11 {
      %c0_10 = arith.constant 0 : index
      %c0_11 = arith.constant 0 : index
      %12 = vector.load %arg7[%c0_10, %c0_11] : memref<8x96xf32, #tpu.memory_space<vmem>>, vector<8x96xf32>
      %c0_12 = arith.constant 0 : index
      %c0_13 = arith.constant 0 : index
      %13 = vector.load %arg5[%c0_12, %c0_13] : memref<1x96xf32, #tpu.memory_space<vmem>>, vector<1x96xf32>
      %14 = vector.broadcast %13 : vector<1x96xf32> to vector<8x96xf32>
      %15 = arith.addf %12, %14 : vector<8x96xf32>
      %c0_14 = arith.constant 0 : index
      %c0_15 = arith.constant 0 : index
      %16 = vector.load %arg6[%c0_14, %c0_15] : memref<8x96xf32, #tpu.memory_space<vmem>>, vector<8x96xf32>
      tpu.vector_store %arg6[%c0_14, %c0_15], %15 {strides = array<i32>} : memref<8x96xf32, #tpu.memory_space<vmem>>, vector<8x96xf32>,
    } else {
    }
    return
  }
  func.func @transform_0(%arg0: i32, %arg1: i32, %arg2: i32) -> (i32, i32) {
    %c0_i32 = arith.constant 0 : i32
    return %arg0, %arg2 : i32, i32
  }
  func.func @transform_1(%arg0: i32, %arg1: i32, %arg2: i32) -> (i32, i32) {
    %c0_i32 = arith.constant 0 : i32
    return %arg2, %arg1 : i32, i32
  }
  func.func @transform_2(%arg0: i32, %arg1: i32, %arg2: i32) -> (i32, i32) {
    %c0_i32 = arith.constant 0 : i32
    %c0_i32_0 = arith.constant 0 : i32
    return %c0_i32, %arg1 : i32, i32
  }
  func.func @transform_3(%arg0: i32, %arg1: i32, %arg2: i32) -> (i32, i32) {
    %c0_i32 = arith.constant 0 : i32
    return %arg0, %arg1 : i32, i32
  }
}

</mosaic_0001>

<llo_original>
// kernel: tpu_custom_call.1
$region0: #{tpu_custom_call.1}
  #allocation0 [shape = 'u32[]', space=smem, size = 0x4, offset = 0x4, fixed_abs, tag = 'smem constant byte address 0x4 - core index']
  #allocation1 [shape = 'u32[144,128]{1,0:T(1,128)}', space=vmem, size = 0x12000, scoped, tag = 'internal scratch']
  #allocation2 [shape = 'f32[8,96]{1,0:T(8,128)}', space=vmem, size = 0x1000, scoped, tag = 'scratch operand']
  %s0 = inlined_call_operand.hbm [shape: f32[16,32], index: 0, kind: input, shape index: {}]
  %s1 = inlined_call_operand.hbm [shape: f32[32,96], index: 1, kind: input, shape index: {}]
  %s2 = inlined_call_operand.vmem [shape: f32[1,96], index: 2, kind: input, shape index: {}]
  %s3 = inlined_call_operand.hbm [shape: f32[16,96], index: 3, kind: output, shape index: {}]
  %s4 = sld [smem:[#allocation0]]
  $region61: #{tpu_custom_call.1} parent=0
    _
  %s6 = ssub.s32 1, %s4
  %s7 = scalar_select 0, %s6, %s4
  $region1: #{tpu_custom_call.1} parent=0
    #allocation3 [shape = 'u8[8192]{0}', space=vmem, size = 0x2000, scoped, tag = 'input window, operand 0']
    #allocation4 [shape = 's32[2]{0}', space=sflag, size = 0x8, scoped, tag = 'scoped memory for tpu_custom_call.1']
    #allocation5 [shape = 's32[2]{0}', space=sflag, size = 0x8, scoped, tag = 'scoped memory for tpu_custom_call.1']
    #allocation6 [shape = 'u8[16384]{0}', space=vmem, size = 0x4000, scoped, tag = 'input window, operand 1, single buffered']
    #allocation7 [shape = 's32[1]{0}', space=sflag, size = 0x4, scoped, tag = 'scoped memory for tpu_custom_call.1']
    #allocation8 [shape = 'u8[8192]{0}', space=vmem, size = 0x2000, scoped, tag = 'output window, operand 0']
    %8 = vsyncpa [#allocation4], 0
    %s9 = scalar_lea.sflag [#allocation4], 1
    %10 = vsyncpa %s9, 0
    %11 = vsyncpa [#allocation7], 0
    %12 = vsyncpa [#allocation5], 0
    %s13 = scalar_lea.sflag [#allocation5], 1
    %14 = vsyncpa %s13, 0
    loop: start=0, step=1, limit=4
    $region2: #{tpu_custom_call.1} parent=1 // loop_pre_header
      _
    $region3: #{tpu_custom_call.1} parent=1 // loop_header
      %s16 = sphi 0, %s20
      %p17 = scmp.ge.s32.totalorder %s16, 4
      %s23 = sphi 0, %s42
      %s24 = sphi 0, %s38
      %s25 = sphi 0, %s34
      %s26 = sphi 0, %s23
      %s27 = sphi 0, %s24
      %s28 = sphi 0, %s25
      %s29 = sphi 0, %s26
      %s30 = sphi 0, %s27
      %s31 = sphi 0, %s28
      %s47 = sphi 0, %s49
      %s50 = sphi 0, %s47
      %s51 = sphi 0, %s50
      %s67 = sphi 0, %s51
      %s75 = sphi 0, %s77
      %s78 = sphi 0, %s75
      %s79 = sphi 0, %s78
      %s95 = sphi 0, %s79
      %s101 = sphi 0, %s103
      %s104 = sphi 0, %s101
      %s105 = sphi 0, %s104
      %s121 = sphi 0, %s105
      %s129 = sphi 0, %s131
      %s132 = sphi 0, %s129
      %s133 = sphi 0, %s132
      %s149 = sphi 0, %s133
    $region4: #{tpu_custom_call.1} parent=1 // loop_header_branch
      %19 = sbr.rel (%p17) target = $region8
    $region5: #{tpu_custom_call.1} parent=1 // loop_body
      %s21 = ssub.s32 %s16, 1
      %s22 = ssub.s32 %s16, 2
      %s32 = sadd.s32 1, %s25
      %p33 = scmp.ge.s32.totalorder %s32, 1
      %s34 = scalar_select %p33, 0, %s32
      %s35 = sadd.s32 1, %s24
      %s36 = scalar_select %p33, %s35, %s24
      %p37 = scmp.ge.s32.totalorder %s36, 1
      %s38 = scalar_select %p37, 0, %s36
      %s39 = sadd.s32 1, %s23
      %s40 = scalar_select %p37, %s39, %s23
      %p41 = scmp.ge.s32.totalorder %s40, 2
      %s42 = scalar_select %p41, 0, %s40
      %s43 = ssub.s32 %s23, %s42
      %s44 = ssub.s32 %s25, %s34
      %s45 = sor.u32 %s43, %s44
      %p46 = scmp.eq.s32.totalorder %s45, 0
      %s48 = sadd.s32 %s47, 1
      %s49 = scalar_select %p46, %s47, %s48
      %p52 = pneg %p46
      %p53 = scmp.eq.s32.totalorder %s16, 1
      %p54 = por %p52, %p53
      %p55 = scmp.ne.s32.totalorder %s47, %s50
      %p56 = scmp.eq.s32.totalorder %s16, 0
      %p57 = por %p55, %p56
      %p58 = scmp.ne.s32.totalorder %s47, %s50
      %p59 = scmp.eq.s32.totalorder %s21, 1
      %p60 = por %p58, %p59
      %p61 = scmp.ne.s32.totalorder %s50, %s51
      %p62 = scmp.eq.s32.totalorder %s21, 0
      %p63 = por %p61, %p62
      %p64 = scmp.ne.s32.totalorder %s50, %s51
      %p65 = scmp.eq.s32.totalorder %s22, 1
      %p66 = por %p64, %p65
      %p68 = scmp.ne.s32.totalorder %s51, %s67
      %p69 = scmp.eq.s32.totalorder %s22, 0
      %p70 = por %p68, %p69
      %s71 = ssub.s32 %s25, %s34
      %s72 = ssub.s32 %s24, %s38
      %s73 = sor.u32 %s71, %s72
      %p74 = scmp.eq.s32.totalorder %s73, 0
      %s76 = sadd.s32 %s75, 1
      %s77 = scalar_select %p74, %s75, %s76
      %p80 = pneg %p74
      %p81 = scmp.eq.s32.totalorder %s16, 1
      %p82 = por %p80, %p81
      %p83 = scmp.ne.s32.totalorder %s75, %s78
      %p84 = scmp.eq.s32.totalorder %s16, 0
      %p85 = por %p83, %p84
      %p86 = scmp.ne.s32.totalorder %s75, %s78
      %p87 = scmp.eq.s32.totalorder %s21, 1
      %p88 = por %p86, %p87
      %p89 = scmp.ne.s32.totalorder %s78, %s79
      %p90 = scmp.eq.s32.totalorder %s21, 0
      %p91 = por %p89, %p90
      %p92 = scmp.ne.s32.totalorder %s78, %s79
      %p93 = scmp.eq.s32.totalorder %s22, 1
      %p94 = por %p92, %p93
      %p96 = scmp.ne.s32.totalorder %s79, %s95
      %p97 = scmp.eq.s32.totalorder %s22, 0
      %p98 = por %p96, %p97
      %s99 = ssub.s32 %s24, %s38
      %p100 = scmp.eq.s32.totalorder %s99, 0
      %s102 = sadd.s32 %s101, 1
      %s103 = scalar_select %p100, %s101, %s102
      %p106 = pneg %p100
      %p107 = scmp.eq.s32.totalorder %s16, 1
      %p108 = por %p106, %p107
      %p109 = scmp.ne.s32.totalorder %s101, %s104
      %p110 = scmp.eq.s32.totalorder %s16, 0
      %p111 = por %p109, %p110
      %p112 = scmp.ne.s32.totalorder %s101, %s104
      %p113 = scmp.eq.s32.totalorder %s21, 1
      %p114 = por %p112, %p113
      %p115 = scmp.ne.s32.totalorder %s104, %s105
      %p116 = scmp.eq.s32.totalorder %s21, 0
      %p117 = por %p115, %p116
      %p118 = scmp.ne.s32.totalorder %s104, %s105
      %p119 = scmp.eq.s32.totalorder %s22, 1
      %p120 = por %p118, %p119
      %p122 = scmp.ne.s32.totalorder %s105, %s121
      %p123 = scmp.eq.s32.totalorder %s22, 0
      %p124 = por %p122, %p123
      %s125 = ssub.s32 %s23, %s42
      %s126 = ssub.s32 %s24, %s38
      %s127 = sor.u32 %s125, %s126
      %p128 = scmp.eq.s32.totalorder %s127, 0
      %s130 = sadd.s32 %s129, 1
      %s131 = scalar_select %p128, %s129, %s130
      %p134 = pneg %p128
      %p135 = scmp.eq.s32.totalorder %s16, 1
      %p136 = por %p134, %p135
      %p137 = scmp.ne.s32.totalorder %s129, %s132
      %p138 = scmp.eq.s32.totalorder %s16, 0
      %p139 = por %p137, %p138
      %p140 = scmp.ne.s32.totalorder %s129, %s132
      %p141 = scmp.eq.s32.totalorder %s21, 1
      %p142 = por %p140, %p141
      %p143 = scmp.ne.s32.totalorder %s132, %s133
      %p144 = scmp.eq.s32.totalorder %s21, 0
      %p145 = por %p143, %p144
      %p146 = scmp.ne.s32.totalorder %s132, %s133
      %p147 = scmp.eq.s32.totalorder %s22, 1
      %p148 = por %p146, %p147
      %p150 = scmp.ne.s32.totalorder %s133, %s149
      %p151 = scmp.eq.s32.totalorder %s22, 0
      %p152 = por %p150, %p151
      %p153 = scmp.le.s32.totalorder 1, %s16
      %p154 = scmp.lt.s32.totalorder %s16, 3
      %p155 = pnand %p153, %p154
      %p156 = pneg %p155
      // Predicated region
      $region9: #{tpu_custom_call.1} parent=5 // pred_check
        _
      $region10: #{tpu_custom_call.1} parent=5 // pred_check_branch
        %158 = sbr.rel (%p155) target = $region12
      $region11: #{tpu_custom_call.1} parent=5 // pred_region
        %s159 = ssub.s32 %s16, 1
        // Predicated region
        $region13: #{tpu_custom_call.1} parent=11 // pred_check
          %p160 = pneg %p91
        $region14: #{tpu_custom_call.1} parent=11 // pred_check_branch
          %162 = sbr.rel (%p160) target = $region16
        $region15: #{tpu_custom_call.1} parent=11 // pred_region
          %s163 = smul.u32 4, %s28
          %s165 = ssub.s32 512, 512
          %166 = vsyncadd [#allocation7], %s165
          %s167 = sadd.s32 %s27, %s163
          %s168 = smul.addr %s167, 128
          %s169 = scalar_lea.hbm %s1, %s168
          %s170 = sshll.u32 [#allocation6], 4
          %s171 = int_to_ptr.vmem [resolvable:$true] %s170
          %176 = dma.hbm_to_vmem [thread:$0]  %s169, 512, %s171, [#allocation7], 128, 128, 8
        $region16: #{tpu_custom_call.1} parent=11 // pred_fallthru
          _
        // Predicated region
        $region17: #{tpu_custom_call.1} parent=11 // pred_check
          %p177 = pneg %p117
        $region18: #{tpu_custom_call.1} parent=11 // pred_check_branch
          %179 = sbr.rel (%p177) target = $region20
        $region19: #{tpu_custom_call.1} parent=11 // pred_region
          %p180 = scmp.lt.s32.totalorder %s27, 0
          %s181 = scalar_select %p180, %s27, 0
          %s182 = scalar_lea.vmem %s2, %s181
        $region20: #{tpu_custom_call.1} parent=11 // pred_fallthru
          _
      $region12: #{tpu_custom_call.1} parent=5 // pred_fallthru
        _
      %p183 = scmp.lt.s32.totalorder %s16, 2
      // Predicated region
      $region21: #{tpu_custom_call.1} parent=5 // pred_check
        %p184 = pneg %p183
      $region22: #{tpu_custom_call.1} parent=5 // pred_check_branch
        %186 = sbr.rel (%p184) target = $region24
      $region23: #{tpu_custom_call.1} parent=5 // pred_region
        // Predicated region
        $region25: #{tpu_custom_call.1} parent=23 // pred_check
          %p187 = pneg %p57
        $region26: #{tpu_custom_call.1} parent=23 // pred_check_branch
          %189 = sbr.rel (%p187) target = $region28
        $region27: #{tpu_custom_call.1} parent=23 // pred_region
          %s190 = sand.u32 %s47, 1
          %s191 = scalar_lea.sflag [#allocation4], %s190
          %s192 = sand.u32 %s47, 1
          %s193 = smul.addr %s192, 8
          %s194 = scalar_lea.vmem [#allocation3], %s193
          %s196 = ssub.s32 128, 128
          %197 = vsyncadd %s191, %s196
          %s198 = sadd.s32 %s25, %s23
          %s199 = smul.addr %s198, 128
          %s200 = scalar_lea.hbm %s0, %s199
          %s202 = sshll.u32 %s194, 4
          %s203 = int_to_ptr.vmem [resolvable:$true] %s202
          %205 = dma.hbm_to_vmem [thread:$0]  %s200, 128, %s203, %s191
        $region28: #{tpu_custom_call.1} parent=23 // pred_fallthru
          _
      $region24: #{tpu_custom_call.1} parent=5 // pred_fallthru
        _
      %p206 = scmp.le.s32.totalorder 1, %s16
      %p207 = scmp.lt.s32.totalorder %s16, 3
      %p208 = pnand %p206, %p207
      %p209 = pneg %p208
      // Predicated region
      $region29: #{tpu_custom_call.1} parent=5 // pred_check
        _
      $region30: #{tpu_custom_call.1} parent=5 // pred_check_branch
        %211 = sbr.rel (%p208) target = $region32
      $region31: #{tpu_custom_call.1} parent=5 // pred_region
        %s212 = ssub.s32 %s16, 1
        %s213 = sand.u32 %s50, 1
        %s214 = scalar_lea.sflag [#allocation4], %s213
        %s215 = sand.u32 %s50, 1
        %s216 = smul.addr %s215, 8
        %s217 = scalar_lea.vmem [#allocation3], %s216
        // Predicated region
        $region33: #{tpu_custom_call.1} parent=31 // pred_check
          %p218 = pneg %p63
        $region34: #{tpu_custom_call.1} parent=31 // pred_check_branch
          %220 = sbr.rel (%p218) target = $region36
        $region35: #{tpu_custom_call.1} parent=31 // pred_region
          %221 = dma.done %s214, 128
        $region36: #{tpu_custom_call.1} parent=31 // pred_fallthru
          _
        // Predicated region
        $region37: #{tpu_custom_call.1} parent=31 // pred_check
          %p222 = pneg %p91
        $region38: #{tpu_custom_call.1} parent=31 // pred_check_branch
          %224 = sbr.rel (%p222) target = $region40
        $region39: #{tpu_custom_call.1} parent=31 // pred_region
          %225 = dma.done [#allocation7], 512
        $region40: #{tpu_custom_call.1} parent=31 // pred_fallthru
          _
        %s226 = sand.u32 %s50, 1
        %s227 = scalar_lea.sflag [#allocation4], %s226
        %s228 = sand.u32 %s50, 1
        %s229 = smul.addr %s228, 8
        %s230 = scalar_lea.vmem [#allocation3], %s229
        %p231 = pneg %p63
        %p232 = pneg %p60
        %p233 = pneg %p91
        %p234 = pneg %p88
        %p235 = scmp.lt.s32.totalorder %s27, 0
        %s236 = scalar_select %p235, %s27, 0
        %s237 = scalar_lea.vmem %s2, %s236
        %p238 = pneg %p117
        %p239 = pneg %p114
        %p240 = pneg %p145
        %p241 = pneg %p142
        %s242 = sand.u32 %s132, 1
        %s243 = scalar_lea.sflag [#allocation5], %s242
        %s244 = sand.u32 %s132, 1
        %s245 = smul.addr %s244, 8
        %s246 = scalar_lea.vmem [#allocation8], %s245
        %s247 = smul.u32 4, %s28
        %p248 = scmp.lt.s32.totalorder %s27, 0
        %s249 = scalar_select %p248, %s27, 0
        %s250 = scalar_lea.vmem %s2, %s249
        %p251 = scmp.eq.s32.totalorder %s28, 0
        // Predicated region
        $region41: #{tpu_custom_call.1} parent=31 // pred_check
          %p252 = pneg %p251
        $region42: #{tpu_custom_call.1} parent=31 // pred_check_branch
          %254 = sbr.rel (%p252) target = $region44
        $region43: #{tpu_custom_call.1} parent=31 // pred_region
          %vm255 = vcmask 785408
          %256 = vst.msk [vmem:[#allocation2] sm:$0xff] %vm255, 0.0
        $region44: #{tpu_custom_call.1} parent=31 // pred_fallthru
          _
        %v257 = vld [vmem:[#allocation2] sm:$0xff]
        %v258 = vld [vmem:[%s217] sm:$0xff]
        %v259 = vld [vmem:[#allocation6] sm:$0xff]
        %v260 = vld [vmem:[#allocation6 + $0x8] sm:$0xff]
        %v261 = vld [vmem:[#allocation6 + $0x10] sm:$0xff]
        %v262 = vld [vmem:[#allocation6 + $0x18] sm:$0xff]
        %vm263 = vcmask 261120
        %v265 = vsel %vm263, %v258, 0
        %267 = vmatprep.subr.mxu0 0.0
        %268 = vmatpush1.msra.mxu0 %v259
        %269 = vmatprep.subr.mxu0 0.0
        %270 = vmatpush1.msra.mxu0 %v260
        %271 = vmatprep.subr.mxu0 0.0
        %272 = vmatpush1.msra.mxu0 %v261
        %273 = vmatprep.subr.mxu0 0.0
        %274 = vmatpush1.msra.mxu0 %v262
        %275 = vmatprep.subr.mxu0 0.0
        %276 = vmatpush1.msra.mxu0 0.0
        %277 = vmatprep.subr.mxu0 0.0
        %278 = vmatpush1.msra.mxu0 0.0
        %279 = vmatprep.subr.mxu0 0.0
        %280 = vmatpush1.msra.mxu0 0.0
        %281 = vmatprep.subr.mxu0 0.0
        %282 = vmatpush1.msra.mxu0 0.0
        %283 = vmatprep.subr.mxu0 0.0
        %284 = vmatpush1.msra.mxu0 0.0
        %285 = vmatprep.subr.mxu0 0.0
        %286 = vmatpush1.msra.mxu0 0.0
        %287 = vmatprep.subr.mxu0 0.0
        %288 = vmatpush1.msra.mxu0 0.0
        %289 = vmatprep.subr.mxu0 0.0
        %290 = vmatpush1.msra.mxu0 0.0
        %291 = vmatprep.subr.mxu0 0.0
        %292 = vmatpush1.msra.mxu0 0.0
        %293 = vmatprep.subr.mxu0 0.0
        %294 = vmatpush1.msra.mxu0 0.0
        %295 = vmatprep.subr.mxu0 0.0
        %296 = vmatpush1.msra.mxu0 0.0
        %297 = vmatprep.subr.mxu0 0.0
        %298 = vmatpush1.msra.mxu0 0.0
        %299 = vmatprep.subr.mxu0 0.0
        %300 = vmatpush1.msra.mxu0 0.0
        %301 = vmatprep.subr.mxu0 0.0
        %302 = vmatpush1.msra.mxu0 0.0
        %303 = vmatprep.subr.mxu0 0.0
        %304 = vmatpush1.msra.mxu0 0.0
        %305 = vmatprep.subr.mxu0 0.0
        %306 = vmatpush1.msra.mxu0 0.0
        %307 = vmatprep.subr.mxu0 0.0
        %308 = vmatpush1.msra.mxu0 0.0
        %309 = vmatprep.subr.mxu0 0.0
        %310 = vmatpush1.msra.mxu0 0.0
        %311 = vmatprep.subr.mxu0 0.0
        %312 = vmatpush1.msra.mxu0 0.0
        %313 = vmatprep.subr.mxu0 0.0
        %314 = vmatpush1.msra.mxu0 0.0
        %315 = vmatprep.subr.mxu0 0.0
        %316 = vmatpush1.msra.mxu0 0.0
        %317 = vmatprep.subr.mxu0 0.0
        %318 = vmatpush1.msra.mxu0 0.0
        %319 = vmatprep.subr.mxu0 0.0
        %320 = vmatpush1.msra.mxu0 0.0
        %321 = vmatprep.subr.mxu0 0.0
        %322 = vmatpush1.msra.mxu0 0.0
        %323 = vmatprep.subr.mxu0 0.0
        %324 = vmatpush1.msra.mxu0 0.0
        %325 = vmatprep.subr.mxu0 0.0
        %326 = vmatpush1.msra.mxu0 0.0
        %327 = vmatprep.subr.mxu0 0.0
        %328 = vmatpush1.msra.mxu0 0.0
        %329 = vmatprep.subr.mxu0 0.0
        %330 = vmatpush1.msra.mxu0 0.0
        %331 = vmatprep.mubr.f32.mxu0 0.0
        %332 = vmatmul.mubr.f32.gmra.mrb[0].mxu0 %v265
        %v333 = vpop.f32.mrb[0].mxu0
        %v334 = vadd.f32 0.0, %v333
        %v335 = vpop.f32.mrb[0].mxu0
        %336 = vdwg.mxu0
        %v337 = vadd.f32 %v257, %v334
        %vm338 = vcmask 785408
        %339 = vst.msk [vmem:[#allocation2] sm:$0xff] %vm338, %v337
        // Predicated region
        $region45: #{tpu_custom_call.1} parent=31 // pred_check
          %p340 = pneg %p251
        $region46: #{tpu_custom_call.1} parent=31 // pred_check_branch
          %342 = sbr.rel (%p340) target = $region48
        $region47: #{tpu_custom_call.1} parent=31 // pred_region
          %v343 = vld [vmem:[#allocation2] sm:$0xff]
          %v344 = vld [vmem:[%s250] sm:$0x1]
          %v346 = vlaneseq
          %v347 = vshrl.u32 %v346, 7
          %v348 = vsub.s32 0, %v347
          %v349 = vrot.slane %v344, %v348
          %v351 = vadd.f32 %v343, %v349
          %352 = vst.msk [vmem:[%s246] sm:$0xff] %vm338, %v351
        $region48: #{tpu_custom_call.1} parent=31 // pred_fallthru
          _
        %s353 = sand.u32 %s132, 1
        %s354 = scalar_lea.sflag [#allocation5], %s353
        %s355 = sand.u32 %s132, 1
        %s356 = smul.addr %s355, 8
        %s357 = scalar_lea.vmem [#allocation8], %s356
        // Predicated region
        $region49: #{tpu_custom_call.1} parent=31 // pred_check
          %p358 = pneg %p142
        $region50: #{tpu_custom_call.1} parent=31 // pred_check_branch
          %360 = sbr.rel (%p358) target = $region52
        $region51: #{tpu_custom_call.1} parent=31 // pred_region
          %s362 = ssub.s32 128, 128
          %363 = vsyncadd %s354, %s362
          %s364 = sadd.s32 %s27, %s26
          %s365 = smul.addr %s364, 128
          %s366 = scalar_lea.hbm %s3, %s365
          %s368 = sshll.u32 %s357, 4
          %s369 = int_to_ptr.vmem [resolvable:$true] %s368
          %371 = dma.vmem_to_hbm [thread:$0]  %s369, 128, %s366, %s354
        $region52: #{tpu_custom_call.1} parent=31 // pred_fallthru
          _
      $region32: #{tpu_custom_call.1} parent=5 // pred_fallthru
        _
      %p372 = scmp.le.s32.totalorder 2, %s16
      // Predicated region
      $region53: #{tpu_custom_call.1} parent=5 // pred_check
        %p373 = pneg %p372
      $region54: #{tpu_custom_call.1} parent=5 // pred_check_branch
        %375 = sbr.rel (%p373) target = $region56
      $region55: #{tpu_custom_call.1} parent=5 // pred_region
        %s376 = ssub.s32 %s16, 2
        // Predicated region
        $region57: #{tpu_custom_call.1} parent=55 // pred_check
          %p377 = pneg %p148
        $region58: #{tpu_custom_call.1} parent=55 // pred_check_branch
          %379 = sbr.rel (%p377) target = $region60
        $region59: #{tpu_custom_call.1} parent=55 // pred_region
          %s380 = sand.u32 %s133, 1
          %s381 = scalar_lea.sflag [#allocation5], %s380
          %s382 = sand.u32 %s133, 1
          %s383 = smul.addr %s382, 8
          %s384 = scalar_lea.vmem [#allocation8], %s383
          %385 = dma.done %s381, 128
        $region60: #{tpu_custom_call.1} parent=55 // pred_fallthru
          _
      $region56: #{tpu_custom_call.1} parent=5 // pred_fallthru
        _
    $region6: #{tpu_custom_call.1} parent=1 // loop_footer
      %s20 = sadd.s32 1, %s16
    $region7: #{tpu_custom_call.1} parent=1 // loop_footer_branch
      %15 = sbr.rel target = $region3
    $region8: #{tpu_custom_call.1} parent=1 // loop_exit
      _
    %386 = vsyncpa [#allocation4], 1
    %s387 = scalar_lea.sflag [#allocation4], 1
    %388 = vsyncpa %s387, 1
    %389 = vsyncpa [#allocation7], 1
    %390 = vsyncpa [#allocation5], 1
    %s391 = scalar_lea.sflag [#allocation5], 1
    %392 = vsyncpa %s391, 1

</llo_original>
